<compile_context>
chip_gen: v7x
topology: tpu7x:2x2x1
jax: 0.10.0
libtpu: 0.0.40
codegen_flags: <defaults>
</compile_context>

<pallas_src>
import math
import functools

import jax
import jax.numpy as jnp
from jax import lax
from jax.experimental import pallas as pl
from jax.experimental.pallas import tpu as pltpu


VMEM_LIMIT_BYTES = 64 * 1024 * 1024  # explicit scoped-VMEM limit (<= physical on v5e/v6e/v7x)


def _tile(n, cap, align):
    """Largest tile <= cap that divides n and is a multiple of `align`; falls back to n (full dim,
    which is always legal for the last two block dims)."""
    if n <= cap:
        return n
    t = (cap // align) * align
    while t >= align:
        if n % t == 0:
            return t
        t -= align
    return n


# --------------------------------------------------------------------------------------------
# Pass 1: full-width linear projection  y = (x @ W) * scale   (bf16 in / f32 acc / bf16 out)
# --------------------------------------------------------------------------------------------
def _linear_kernel(x_ref, w_ref, o_ref, acc_ref, *, scale):
    @pl.when(pl.program_id(2) == 0)
    def _():
        acc_ref[...] = jnp.zeros_like(acc_ref)

    acc_ref[...] += jnp.dot(x_ref[...], w_ref[...], preferred_element_type=jnp.float32)

    @pl.when(pl.program_id(2) == pl.num_programs(2) - 1)
    def _():
        acc = acc_ref[...]
        if scale != 1.0:                      # static fold of 1/sqrt(d_k) into the Q projection
            acc = acc * scale
        o_ref[...] = acc.astype(o_ref.dtype)


def _linear(x2d, w, *, scale=1.0, out_dtype=jnp.bfloat16, bm=256, bn=256, bk=512):
    M, K = x2d.shape
    K2, N = w.shape
    assert K == K2
    tm = _tile(M, bm, 8)
    tn = _tile(N, bn, 128)
    tk = _tile(K, bk, 128)
    grid = (M // tm, N // tn, K // tk)

    return pl.pallas_call(
        functools.partial(_linear_kernel, scale=scale),
        out_shape=jax.ShapeDtypeStruct((M, N), out_dtype),
        grid_spec=pltpu.PrefetchScalarGridSpec(
            num_scalar_prefetch=0,
            grid=grid,
            in_specs=[pl.BlockSpec((tm, tk), lambda i, j, kk: (i, kk)),
                      pl.BlockSpec((tk, tn), lambda i, j, kk: (kk, j))],
            out_specs=pl.BlockSpec((tm, tn), lambda i, j, kk: (i, j)),
            scratch_shapes=[pltpu.VMEM((tm, tn), jnp.float32)]),
        compiler_params=pltpu.CompilerParams(
            dimension_semantics=("parallel", "parallel", "arbitrary"),
            vmem_limit_bytes=VMEM_LIMIT_BYTES),
    )(x2d, w)


# --------------------------------------------------------------------------------------------
# Pass 2: flash attention (online softmax) over pre-projected heads, with W_o fused in finalize
# --------------------------------------------------------------------------------------------
def _flash_kernel(qp_ref, kp_ref, vp_ref, wo_ref, o_ref,
                  m_sc, l_sc, acc_sc, x_sc, *, h, d_k):
    """One grid step: (batch b, q-tile qi, kv-tile ki).

    Refs:
      qp_ref          (1, h, tq, d_k) bf16  pre-scaled projected queries
      kp_ref, vp_ref  (1, h, tk, d_k) bf16  projected keys / values
      wo_ref          (D, D)          bf16  output-projection weight (d_in, d_out)
      o_ref           (1, tq, D)            resident across the kv axis
    Scratch (persists across the kv axis for a fixed (b, qi)):
      m_sc, l_sc      (h, tq, 1)   f32      online-softmax running max / denom
      acc_sc          (h, tq, d_k) f32      un-normalized per-head outputs
      x_sc            (tq, D)      bf16     assembled heads (input of the fused W_o matmul)
    """
    ki = pl.program_id(2)

    @pl.when(ki == 0)
    def _init():
        m_sc[...] = jnp.full_like(m_sc, -jnp.inf)
        l_sc[...] = jnp.zeros_like(l_sc)
        acc_sc[...] = jnp.zeros_like(acc_sc)

    q = qp_ref[0]                                                   # (h, tq, d_k) bf16
    k = kp_ref[0]                                                   # (h, tk, d_k) bf16
    v = vp_ref[0]                                                   # (h, tk, d_k) bf16

    # Batched scores over heads, contracting d_k (trans_b form, no explicit k transpose).
    s = jnp.einsum("hqd,hkd->hqk", q, k,
                   preferred_element_type=jnp.float32)              # (h, tq, tk) f32
    # NOTE: mask intentionally NOT applied (reference discards masked_fill's result).

    m_prev = m_sc[...]
    m_new = jnp.maximum(m_prev, jnp.max(s, axis=-1, keepdims=True))
    alpha = jnp.exp(m_prev - m_new)                                 # f32 stats (v5e-safe)
    p = jnp.exp(s - m_new)
    l_sc[...] = alpha * l_sc[...] + jnp.sum(p, axis=-1, keepdims=True)
    pv = jnp.einsum("hqk,hkd->hqd", p.astype(v.dtype), v,
                    preferred_element_type=jnp.float32)             # (h, tq, d_k) f32
    acc_sc[...] = alpha * acc_sc[...] + pv
    m_sc[...] = m_new

    # Last kv tile: normalize, assemble heads into a (tq, D) bf16 slab, single W_o matmul.
    @pl.when(ki == pl.num_programs(2) - 1)
    def _finalize():
        inv_l = pl.reciprocal(l_sc[...], approx=True)               # EUP slot, ~free
        for hh in range(h):                                         # h is static -> unrolled
            x_sc[:, hh * d_k:(hh + 1) * d_k] = (acc_sc[hh] * inv_l[hh]).astype(x_sc.dtype)
        # Full-width, full-depth output projection: (tq, D) @ (D, D), lane-dense store.
        o_ref[0] = jnp.dot(x_sc[...], wo_ref[...],
                           preferred_element_type=jnp.float32).astype(o_ref.dtype)


def multi_head_attention(q, k, v, mask, wq, wk, wv, wo, *, h,
                         block_q=128, block_k=256):
    """q: (B,Sq,D); k,v: (B,Sk,D); wq/wk/wv/wo: (D,D) pre-transposed (d_in,d_out).
    mask accepted but ignored (the reference discards the masked_fill result).
    block_q/block_k: sweep per chip (v6e/v7x: tk=256, tq 128-256; v5e: tq 256-512, tk 128)."""
    del mask  # reference's masked_fill result is discarded -> mask has no effect on the output
    B, Sq, D = q.shape
    _, Sk, _ = k.shape
    assert D % h == 0, "d_model is not dividable by h"
    d_k = D // h
    scale = 1.0 / math.sqrt(d_k)

    wq_b, wk_b, wv_b, wo_b = (w.astype(jnp.bfloat16) for w in (wq, wk, wv, wo))

    # ---- Pass 1: hoisted, full-width QKV projections (Pallas GEMMs). 1/sqrt(d_k) folded into Q.
    qp = _linear(q.astype(jnp.bfloat16).reshape(B * Sq, D), wq_b, scale=scale)
    kp = _linear(k.astype(jnp.bfloat16).reshape(B * Sk, D), wk_b)
    vp = _linear(v.astype(jnp.bfloat16).reshape(B * Sk, D), wv_b)

    # Layout plumbing to head-major (B, h, S, d_k) is left to XLA (cheap, bandwidth-bound).
    qp = qp.reshape(B, Sq, h, d_k).transpose(0, 2, 1, 3)
    kp = kp.reshape(B, Sk, h, d_k).transpose(0, 2, 1, 3)
    vp = vp.reshape(B, Sk, h, d_k).transpose(0, 2, 1, 3)

    tq = _tile(Sq, block_q, 8)
    tk = _tile(Sk, block_k, 8)
    grid = (B, Sq // tq, Sk // tk)        # kv (reduction) axis last

    q_spec = pl.BlockSpec((1, h, tq, d_k), lambda b, qi, ki: (b, 0, qi, 0))
    kv_spec = pl.BlockSpec((1, h, tk, d_k), lambda b, qi, ki: (b, 0, ki, 0))
    wo_spec = pl.BlockSpec((D, D), lambda b, qi, ki: (0, 0))
    o_spec = pl.BlockSpec((1, tq, D), lambda b, qi, ki: (b, qi, 0))

    kernel = functools.partial(_flash_kernel, h=h, d_k=d_k)

    # Output kept in q.dtype for semantic fidelity; switch to bf16 if downstream tolerates it.
    return pl.pallas_call(
        kernel,
        out_shape=jax.ShapeDtypeStruct((B, Sq, D), q.dtype),
        grid_spec=pltpu.PrefetchScalarGridSpec(
            num_scalar_prefetch=0,
            grid=grid,
            in_specs=[q_spec, kv_spec, kv_spec, wo_spec],
            out_specs=o_spec,
            scratch_shapes=[
                pltpu.VMEM((h, tq, 1), jnp.float32),      # m (running max)
                pltpu.VMEM((h, tq, 1), jnp.float32),      # l (running denominator)
                pltpu.VMEM((h, tq, d_k), jnp.float32),    # acc (un-normalized head outputs)
                pltpu.VMEM((tq, D), jnp.bfloat16),        # assembled heads for the W_o matmul
            ]),
        compiler_params=pltpu.CompilerParams(
            # batch & q-tile axes shard across TensorCores (megacore); kv is the reduction.
            dimension_semantics=("parallel", "parallel", "arbitrary"),
            vmem_limit_bytes=VMEM_LIMIT_BYTES),
    )(qp, kp, vp, wo_b)


# --------------------------------------------------------------------------------------------
# Pure-JAX f32 mirror of the PyTorch forward (sanity check)
# --------------------------------------------------------------------------------------------
def _reference(q, k, v, wq, wk, wv, wo, *, h):
    B, S, D = q.shape
    d_k = D // h
    qp, kp, vp = q @ wq, k @ wk, v @ wv
    qh = qp.reshape(B, S, h, d_k).transpose(0, 2, 1, 3)
    kh = kp.reshape(B, S, h, d_k).transpose(0, 2, 1, 3)
    vh = vp.reshape(B, S, h, d_k).transpose(0, 2, 1, 3)
    scores = jnp.einsum("bhqd,bhkd->bhqk", qh, kh) / math.sqrt(d_k)
    p = jax.nn.softmax(scores, axis=-1)
    x = jnp.einsum("bhqk,bhkd->bhqd", p, vh)
    x = x.transpose(0, 2, 1, 3).reshape(B, S, D)
    return x @ wo


def _run_case(B, S, d_model, h, key, tol):
    kq, kk, kv_, kwq, kwk, kwv, kwo = jax.random.split(key, 7)
    q = jax.random.normal(kq, (B, S, d_model), jnp.float32)
    k = jax.random.normal(kk, (B, S, d_model), jnp.float32)
    v = jax.random.normal(kv_, (B, S, d_model), jnp.float32)
    mask = jnp.ones((B, 1, S, S), jnp.float32)  # accepted but (per reference bug) has no effect

    # Deterministic "nn.Linear" weights (uniform(-1/sqrt(d), 1/sqrt(d))), stored as (d_in, d_out).
    bound = 1.0 / math.sqrt(d_model)
    wq = jax.random.uniform(kwq, (d_model, d_model), jnp.float32, -bound, bound)
    wk = jax.random.uniform(kwk, (d_model, d_model), jnp.float32, -bound, bound)
    wv = jax.random.uniform(kwv, (d_model, d_model), jnp.float32, -bound, bound)
    wo = jax.random.uniform(kwo, (d_model, d_model), jnp.float32, -bound, bound)

    out = multi_head_attention(q, k, v, mask, wq, wk, wv, wo, h=h)
    out = jax.block_until_ready(out)

    ref = _reference(q, k, v, wq, wk, wv, wo, h=h)
    assert out.shape == (B, S, d_model)
    err = float(jnp.max(jnp.abs(out - ref)))
    # bf16 MXU operands + bf16 intermediate projections with f32 accumulation -> loose tolerance.
    assert err < tol, f"max abs err {err} exceeds tolerance {tol}"


if __name__ == "__main__":
    key = jax.random.PRNGKey(0)
    k_small, k_tiled = jax.random.split(key)

    # Toy shapes consistent with the module (single-tile path).
    _run_case(B=2, S=8, d_model=32, h=4, key=k_small, tol=4e-2)
    # Larger shapes to exercise the multi-tile flash (online-softmax, tk=256) path.
    _run_case(B=2, S=512, d_model=128, h=4, key=k_tiled, tol=4e-2)

    print("KERNEL_OK")
</pallas_src>

<mosaic_0001>
module attributes {stable_mosaic.version = 11 : i64} {
  func.func @_linear_kernel(%arg0: i32, %arg1: i32, %arg2: i32, %arg3: memref<16x32xbf16, #tpu.memory_space<vmem>>, %arg4: memref<32x32xbf16, #tpu.memory_space<vmem>>, %arg5: memref<16x32xbf16, #tpu.memory_space<vmem>>, %arg6: memref<16x32xf32, #tpu.memory_space<vmem>>) attributes {dimension_semantics = [#tpu.dimension_semantics<parallel>, #tpu.dimension_semantics<parallel>, #tpu.dimension_semantics<arbitrary>], iteration_bounds = array<i64: 1, 1, 1>, scalar_prefetch = 0 : i64, scratch_operands = 1 : i64, tpu.core_type = #tpu.core_type<tc>, window_params = [{transform_indices = @transform_0, window_bounds = array<i64: 16, 32>}, {transform_indices = @transform_1, window_bounds = array<i64: 32, 32>}, {transform_indices = @transform_2, window_bounds = array<i64: 16, 32>}]} {
    %c0_i32 = arith.constant 0 : i32
    %0 = arith.cmpi eq, %arg2, %c0_i32 : i32
    %1 = arith.extui %0 : i1 to i32
    %c0_i32_0 = arith.constant 0 : i32
    %2 = arith.cmpi ne, %1, %c0_i32_0 : i32
    scf.if %2 {
      %cst_10 = arith.constant 0.000000e+00 : f32
      %12 = vector.broadcast %cst_10 : f32 to vector<16x32xf32>
      %c0_11 = arith.constant 0 : index
      %c0_12 = arith.constant 0 : index
      %13 = vector.load %arg6[%c0_11, %c0_12] : memref<16x32xf32, #tpu.memory_space<vmem>>, vector<16x32xf32>
      tpu.vector_store %arg6[%c0_11, %c0_12], %12 {strides = array<i32>} : memref<16x32xf32, #tpu.memory_space<vmem>>, vector<16x32xf32>,
    } else {
    }
    %c0 = arith.constant 0 : index
    %c0_1 = arith.constant 0 : index
    %3 = vector.load %arg6[%c0, %c0_1] : memref<16x32xf32, #tpu.memory_space<vmem>>, vector<16x32xf32>
    %c0_2 = arith.constant 0 : index
    %c0_3 = arith.constant 0 : index
    %4 = vector.load %arg3[%c0_2, %c0_3] : memref<16x32xbf16, #tpu.memory_space<vmem>>, vector<16x32xbf16>
    %c0_4 = arith.constant 0 : index
    %c0_5 = arith.constant 0 : index
    %5 = vector.load %arg4[%c0_4, %c0_5] : memref<32x32xbf16, #tpu.memory_space<vmem>>, vector<32x32xbf16>
    %cst = arith.constant dense<0.000000e+00> : vector<16x32xf32>
    %6 = tpu.matmul %4, %5, %cst {dimension_numbers = #tpu.dot_dimension_numbers<[1], [0], [0], [1], [0, 0, 1, 1], [], []>} : vector<16x32xbf16>, vector<32x32xbf16>, vector<16x32xf32> -> vector<16x32xf32>
    %7 = arith.addf %3, %6 : vector<16x32xf32>
    %c0_6 = arith.constant 0 : index
    %c0_7 = arith.constant 0 : index
    %8 = vector.load %arg6[%c0_6, %c0_7] : memref<16x32xf32, #tpu.memory_space<vmem>>, vector<16x32xf32>
    tpu.vector_store %arg6[%c0_6, %c0_7], %7 {strides = array<i32>} : memref<16x32xf32, #tpu.memory_space<vmem>>, vector<16x32xf32>,
    %c0_i32_8 = arith.constant 0 : i32
    %9 = arith.cmpi eq, %arg2, %c0_i32_8 : i32
    %10 = arith.extui %9 : i1 to i32
    %c0_i32_9 = arith.constant 0 : i32
    %11 = arith.cmpi ne, %10, %c0_i32_9 : i32
    scf.if %11 {
      %c0_10 = arith.constant 0 : index
      %c0_11 = arith.constant 0 : index
      %12 = vector.load %arg6[%c0_10, %c0_11] : memref<16x32xf32, #tpu.memory_space<vmem>>, vector<16x32xf32>
      %cst_12 = arith.constant 0.353553385 : f32
      %13 = vector.broadcast %cst_12 : f32 to vector<16x32xf32>
      %14 = arith.mulf %12, %13 : vector<16x32xf32>
      %15 = arith.truncf %14 : vector<16x32xf32> to vector<16x32xbf16>
      %c0_13 = arith.constant 0 : index
      %c0_14 = arith.constant 0 : index
      %16 = vector.load %arg5[%c0_13, %c0_14] : memref<16x32xbf16, #tpu.memory_space<vmem>>, vector<16x32xbf16>
      tpu.vector_store %arg5[%c0_13, %c0_14], %15 {strides = array<i32>} : memref<16x32xbf16, #tpu.memory_space<vmem>>, vector<16x32xbf16>,
    } else {
    }
    return
  }
  func.func @transform_0(%arg0: i32, %arg1: i32, %arg2: i32) -> (i32, i32) {
    %c0_i32 = arith.constant 0 : i32
    return %arg0, %arg2 : i32, i32
  }
  func.func @transform_1(%arg0: i32, %arg1: i32, %arg2: i32) -> (i32, i32) {
    %c0_i32 = arith.constant 0 : i32
    return %arg2, %arg1 : i32, i32
  }
  func.func @transform_2(%arg0: i32, %arg1: i32, %arg2: i32) -> (i32, i32) {
    %c0_i32 = arith.constant 0 : i32
    return %arg0, %arg1 : i32, i32
  }
}

</mosaic_0001>

<llo_original>
// kernel: tpu_custom_call.1
$region0: #{tpu_custom_call.1}
  #allocation0 [shape = 'u32[]', space=smem, size = 0x4, offset = 0x4, fixed_abs, tag = 'smem constant byte address 0x4 - core index']
  #allocation1 [shape = 'u32[144,128]{1,0:T(1,128)}', space=vmem, size = 0x12000, scoped, tag = 'internal scratch']
  #allocation2 [shape = 'f32[16,32]{1,0:T(8,128)}', space=vmem, size = 0x2000, scoped, tag = 'scratch operand']
  %s0 = inlined_call_operand.hbm [shape: bf16[16,32], index: 0, kind: input, shape index: {}]
  %s1 = inlined_call_operand.hbm [shape: bf16[32,32], index: 1, kind: input, shape index: {}]
  %s2 = inlined_call_operand.hbm [shape: bf16[16,32], index: 2, kind: output, shape index: {}]
  %s3 = sld [smem:[#allocation0]]
  $region34: #{tpu_custom_call.1} parent=0
    _
  %s5 = ssub.s32 1, %s3
  %s6 = scalar_select 0, %s5, %s3
  $region1: #{tpu_custom_call.1} parent=0
    #allocation3 [shape = 'u8[4096]{0}', space=vmem, size = 0x1000, scoped, tag = 'input window, operand 0, single buffered']
    #allocation4 [shape = 's32[1]{0}', space=sflag, size = 0x4, scoped, tag = 'scoped memory for tpu_custom_call.1']
    #allocation5 [shape = 's32[1]{0}', space=sflag, size = 0x4, scoped, tag = 'scoped memory for tpu_custom_call.1']
    #allocation6 [shape = 'u8[8192]{0}', space=vmem, size = 0x2000, scoped, tag = 'input window, operand 1, single buffered']
    #allocation7 [shape = 's32[1]{0}', space=sflag, size = 0x4, scoped, tag = 'scoped memory for tpu_custom_call.1']
    #allocation8 [shape = 'u8[4096]{0}', space=vmem, size = 0x1000, scoped, tag = 'output window, operand 0, single buffered']
    %7 = vsyncpa [#allocation4], 0
    %8 = vsyncpa [#allocation7], 0
    %9 = vsyncpa [#allocation5], 0
    // Predicated region
    $region2: #{tpu_custom_call.1} parent=1 // pred_check
      _
    $region3: #{tpu_custom_call.1} parent=1 // pred_check_branch
      %11 = sbr.rel (0) target = $region5
    $region4: #{tpu_custom_call.1} parent=1 // pred_region
      %s13 = ssub.s32 128, 128
      %14 = vsyncadd [#allocation4], %s13
      %s15 = sshll.u32 [#allocation3], 4
      %s16 = int_to_ptr.vmem [resolvable:$true] %s15
      %21 = dma.hbm_to_vmem [thread:$0]  %s0, 128, %s16, [#allocation4], 64, 64, 4
    $region5: #{tpu_custom_call.1} parent=1 // pred_fallthru
      _
    // Predicated region
    $region6: #{tpu_custom_call.1} parent=1 // pred_check
      _
    $region7: #{tpu_custom_call.1} parent=1 // pred_check_branch
      %23 = sbr.rel (0) target = $region9
    $region8: #{tpu_custom_call.1} parent=1 // pred_region
      %s25 = ssub.s32 256, 256
      %26 = vsyncadd [#allocation7], %s25
      %s27 = sshll.u32 [#allocation6], 4
      %s28 = int_to_ptr.vmem [resolvable:$true] %s27
      %33 = dma.hbm_to_vmem [thread:$0]  %s1, 256, %s28, [#allocation7], 64, 64, 4
    $region9: #{tpu_custom_call.1} parent=1 // pred_fallthru
      _
    // Predicated region
    $region10: #{tpu_custom_call.1} parent=1 // pred_check
      _
    $region11: #{tpu_custom_call.1} parent=1 // pred_check_branch
      %35 = sbr.rel (0) target = $region13
    $region12: #{tpu_custom_call.1} parent=1 // pred_region
      %36 = dma.done [#allocation4], 128
    $region13: #{tpu_custom_call.1} parent=1 // pred_fallthru
      _
    // Predicated region
    $region14: #{tpu_custom_call.1} parent=1 // pred_check
      _
    $region15: #{tpu_custom_call.1} parent=1 // pred_check_branch
      %38 = sbr.rel (0) target = $region17
    $region16: #{tpu_custom_call.1} parent=1 // pred_region
      %39 = dma.done [#allocation7], 256
    $region17: #{tpu_custom_call.1} parent=1 // pred_fallthru
      _
    %p41 = scmp.eq.s32.totalorder 0, 0
    // Predicated region
    $region18: #{tpu_custom_call.1} parent=1 // pred_check
      %p42 = pneg %p41
    $region19: #{tpu_custom_call.1} parent=1 // pred_check_branch
      %44 = sbr.rel (%p42) target = $region21
    $region20: #{tpu_custom_call.1} parent=1 // pred_region
      %vm45 = vcmask 261120
      %46 = vst.msk [vmem:[#allocation2] sm:$0xff] %vm45, 0.0
      %47 = vst.msk [vmem:[#allocation2 + $0x8] sm:$0xff] %vm45, 0.0
    $region21: #{tpu_custom_call.1} parent=1 // pred_fallthru
      _
    %v48 = vld [vmem:[#allocation2] sm:$0xff]
    %v49 = vld [vmem:[#allocation2 + $0x8] sm:$0xff]
    %v50 = vld [vmem:[#allocation3] sm:$0xf]
    %v51 = vld [vmem:[#allocation3 + $0x4] sm:$0xf]
    %v52 = vld [vmem:[#allocation6] sm:$0xf]
    %v53 = vld [vmem:[#allocation6 + $0x4] sm:$0xf]
    %v54 = vld [vmem:[#allocation6 + $0x8] sm:$0xf]
    %v55 = vld [vmem:[#allocation6 + $0xc] sm:$0xf]
    %v58 = vunpack.c.l.b16 %v50
    %v59 = vunpack.c.l.b16 %v51
    %v60 = vpack.c.b16 %v59, %v58
    %v65 = vunpack.c.l.b16 %v52
    %v66 = vunpack.c.l.b16 %v53
    %v67 = vunpack.c.l.b16 %v54
    %v68 = vunpack.c.l.b16 %v55
    %v69 = vpack.c.b16 %v66, %v65
    %v70 = vpack.c.b16 %v68, %v67
    %vm73 = vcmask 261120
    %v75 = vsel %vm73, %v60, 0
    %77 = vmatprep.subr.bf16.mxu0 0
    %78 = vmatpush1.bf16.msra.mxu0 %v69
    %79 = vmatprep.subr.bf16.mxu0 0
    %80 = vmatpush1.bf16.msra.mxu0 %v70
    %81 = vmatprep.subr.bf16.mxu0 0
    %82 = vmatpush1.bf16.msra.mxu0 0
    %83 = vmatprep.subr.bf16.mxu0 0
    %84 = vmatpush1.bf16.msra.mxu0 0
    %85 = vmatprep.subr.bf16.mxu0 0
    %86 = vmatpush1.bf16.msra.mxu0 0
    %87 = vmatprep.subr.bf16.mxu0 0
    %88 = vmatpush1.bf16.msra.mxu0 0
    %89 = vmatprep.subr.bf16.mxu0 0
    %90 = vmatpush1.bf16.msra.mxu0 0
    %91 = vmatprep.subr.bf16.mxu0 0
    %92 = vmatpush1.bf16.msra.mxu0 0
    %93 = vmatprep.subr.bf16.mxu0 0
    %94 = vmatpush1.bf16.msra.mxu0 0
    %95 = vmatprep.subr.bf16.mxu0 0
    %96 = vmatpush1.bf16.msra.mxu0 0
    %97 = vmatprep.subr.bf16.mxu0 0
    %98 = vmatpush1.bf16.msra.mxu0 0
    %99 = vmatprep.subr.bf16.mxu0 0
    %100 = vmatpush1.bf16.msra.mxu0 0
    %101 = vmatprep.subr.bf16.mxu0 0
    %102 = vmatpush1.bf16.msra.mxu0 0
    %103 = vmatprep.subr.bf16.mxu0 0
    %104 = vmatpush1.bf16.msra.mxu0 0
    %105 = vmatprep.subr.bf16.mxu0 0
    %106 = vmatpush1.bf16.msra.mxu0 0
    %107 = vmatprep.subr.bf16.mxu0 0
    %108 = vmatpush1.bf16.msra.mxu0 0
    %109 = vmatprep.mubr.bf16.mxu0 0
    %110 = vmatmul.mubr.bf16.gmra.mrb[0].mxu0 %v75
    %v111 = vpop.f32.mrb[0].mxu0
    %v112 = vadd.f32 0.0, %v111
    %v113 = vpop.f32.mrb[0].mxu0
    %v114 = vpop.f32.mrb[0].mxu0
    %v115 = vadd.f32 0.0, %v114
    %v116 = vpop.f32.mrb[0].mxu0
    %117 = vdwg.mxu0
    %v118 = vadd.f32 %v48, %v112
    %v119 = vadd.f32 %v49, %v115
    %120 = vst.msk [vmem:[#allocation2] sm:$0xff] %vm73, %v118
    %121 = vst.msk [vmem:[#allocation2 + $0x8] sm:$0xff] %vm73, %v119
    // Predicated region
    $region22: #{tpu_custom_call.1} parent=1 // pred_check
      %p122 = pneg %p41
    $region23: #{tpu_custom_call.1} parent=1 // pred_check_branch
      %124 = sbr.rel (%p122) target = $region25
    $region24: #{tpu_custom_call.1} parent=1 // pred_region
      %v125 = vld [vmem:[#allocation2] sm:$0xff]
      %v126 = vld [vmem:[#allocation2 + $0x8] sm:$0xff]
      %v127 = vmul.f32 %v125, 0.35355338
      %v128 = vmul.f32 %v126, 0.35355338
      %v129 = vpack.c.bf16 %v128, %v127
      %v131 = vunpack.c.l.b16 %v129
      %v132 = vunpack.c.h.b16 %v129
      %v133 = vpack.c.b16 %v131, %v131
      %v134 = vpack.c.b16 %v132, %v132
      %vm137 = vcmask 257024
      %138 = vst.msk [vmem:[#allocation8] sm:$0xf] %vm137, %v133
      %139 = vst.msk [vmem:[#allocation8 + $0x4] sm:$0xf] %vm137, %v134
    $region25: #{tpu_custom_call.1} parent=1 // pred_fallthru
      _
    // Predicated region
    $region26: #{tpu_custom_call.1} parent=1 // pred_check
      _
    $region27: #{tpu_custom_call.1} parent=1 // pred_check_branch
      %141 = sbr.rel (0) target = $region29
    $region28: #{tpu_custom_call.1} parent=1 // pred_region
      %s143 = ssub.s32 128, 128
      %144 = vsyncadd [#allocation5], %s143
      %s145 = sshll.u32 [#allocation8], 4
      %s146 = int_to_ptr.vmem [resolvable:$true] %s145
      %151 = dma.vmem_to_hbm [thread:$0]  %s146, 128, %s2, [#allocation5], 64, 64, 4
    $region29: #{tpu_custom_call.1} parent=1 // pred_fallthru
      _
    // Predicated region
    $region30: #{tpu_custom_call.1} parent=1 // pred_check
      _
    $region31: #{tpu_custom_call.1} parent=1 // pred_check_branch
      %153 = sbr.rel (0) target = $region33
    $region32: #{tpu_custom_call.1} parent=1 // pred_region
      %154 = dma.done [#allocation5], 128
    $region33: #{tpu_custom_call.1} parent=1 // pred_fallthru
      _
    %155 = vsyncpa [#allocation4], 1
    %156 = vsyncpa [#allocation7], 1
    %157 = vsyncpa [#allocation5], 1

</llo_original>
